<compile_context>
chip_gen: v6e
topology: v6e:2x2x1
jax: 0.10.0
libtpu: 0.0.40
codegen_flags: <defaults>
</compile_context>

<pallas_src>
import functools

import jax
import jax.numpy as jnp
from jax.experimental import pallas as pl
from jax.experimental.pallas import tpu as pltpu

_LANE = 128   # TPU lane width
_SUB = 8      # TPU sublane count


def _round_up(x, m):
    return ((x + m - 1) // m) * m


def _vmem_caps():
    """(vmem_limit_bytes, per-block byte budget), generation-aware."""
    try:
        cap = int(pltpu.get_tpu_info().vmem_capacity_bytes)
    except Exception:
        cap = 64 * 1024 * 1024          # conservative default (v7x per-core VMEM)
    vmem_limit = min((cap * 3) // 4, 96 * 1024 * 1024)   # 96 MiB on v5e/v6e, 48 MiB on v7x
    # ~2x in + 2x out double buffers + f32 temporaries + slack.
    block_budget = max(vmem_limit // 8, 512 * 1024)
    return vmem_limit, block_budget


def _plan(R, L, block_budget):
    """Choose (rows_per_block, lanes_per_block, fused?) for an (R, L) working set."""
    row_bytes = _round_up(L, _LANE) * 4          # f32 VMEM footprint of one full-L row
    rows_full_l = block_budget // row_bytes
    if rows_full_l >= R:
        # Whole problem fits the budget; keep >=2 row blocks when possible so
        # megacore / pipelining have a parallel axis.
        tr = R if R <= 2 * _SUB else _round_up(pl.cdiv(R, 2), _SUB)
        return tr, L, True
    if rows_full_l >= _SUB:
        return (rows_full_l // _SUB) * _SUB, L, True     # full-L, tiled rows
    # L must be tiled: fill sublanes with up to 8 rows, size TL from the budget.
    tr = R if R < _SUB else _SUB
    tl = max(_LANE, (block_budget // (tr * 4)) // _LANE * _LANE)
    tl = min(tl, _round_up(L, _LANE))
    return tr, tl, False


def _compiler_params(vmem_limit, *semantics):
    return pltpu.CompilerParams(
        dimension_semantics=semantics,
        vmem_limit_bytes=int(vmem_limit),
    )


# ----------------------------- kernels -------------------------------------
# Internal layout: x block is (TR, TL) with L on lanes.  Per-row scalars
# (mean/std/scale/shift/weight/bias) are (TR, 1) columns.


def _norm_fused_kernel(*refs, n_inv, eps, affine):
    """Single-L-block path: stats + normalize with one read of x."""
    if affine:
        x_ref, w_ref, b_ref, y_ref, mean_ref, std_ref = refs
    else:
        x_ref, y_ref, mean_ref, std_ref = refs

    x = x_ref[...].astype(jnp.float32)                        # (TR, L), lane-dense
    mean = jnp.sum(x, axis=-1, keepdims=True) * n_inv         # XLU lane reduce
    xc = x - mean
    var = jnp.sum(xc * xc, axis=-1, keepdims=True) * n_inv    # shifted: no cancellation
    std = jnp.sqrt(var + eps)
    inv_std = 1.0 / std                                       # exact divide, (TR,1) only
    if affine:
        a = w_ref[...].astype(jnp.float32) * inv_std
        y = xc * a + b_ref[...].astype(jnp.float32)
    else:
        y = xc * inv_std
    y_ref[...] = y.astype(y_ref.dtype)
    mean_ref[...] = mean
    std_ref[...] = std


def _stats_kernel(*refs, n_inv, eps, l_true, tl, need_mask, affine):
    """Tiled path, pass 1: accumulate per-row sum / sum-of-squares over L tiles.

    NOTE: E[x^2]-mean^2 in f32 can lose precision when |mean| >> std; the
    fused path (used whenever the block fits VMEM) avoids this via centering.
    """
    if affine:
        x_ref, w_ref, b_ref, mean_ref, std_ref, a_ref, c_ref, sum_sc, sq_sc = refs
    else:
        x_ref, mean_ref, std_ref, a_ref, c_ref, sum_sc, sq_sc = refs

    li = pl.program_id(1)

    @pl.when(li == 0)
    def _():
        sum_sc[...] = jnp.zeros_like(sum_sc)
        sq_sc[...] = jnp.zeros_like(sq_sc)

    x = x_ref[...].astype(jnp.float32)                        # (TR, TL)
    if need_mask:
        lane = jax.lax.broadcasted_iota(jnp.int32, x.shape, 1) + li * tl
        x = jnp.where(lane < l_true, x, 0.0)                  # OOB tail lanes are garbage
    sum_sc[...] += jnp.sum(x, axis=-1, keepdims=True)
    sq_sc[...] += jnp.sum(x * x, axis=-1, keepdims=True)

    @pl.when(li == pl.num_programs(1) - 1)
    def _():
        mean = sum_sc[...] * n_inv
        var = jnp.maximum(sq_sc[...] * n_inv - mean * mean, 0.0)
        std = jnp.sqrt(var + eps)
        inv_std = 1.0 / std
        if affine:
            a = w_ref[...].astype(jnp.float32) * inv_std      # folded constants
            c = b_ref[...].astype(jnp.float32) - mean * a
        else:
            a = inv_std
            c = -(mean * a)
        mean_ref[...] = mean
        std_ref[...] = std
        a_ref[...] = a
        c_ref[...] = c


def _scale_shift_kernel(x_ref, a_ref, c_ref, y_ref):
    """y = x * a + c with pre-folded per-row constants (norm apply & denorm)."""
    x = x_ref[...].astype(jnp.float32)
    y_ref[...] = (x * a_ref[...] + c_ref[...]).astype(y_ref.dtype)


# ----------------------------- wrappers ------------------------------------


def revin_norm(x, weight=None, bias=None, *, eps=1e-5, affine=True,
               _block_budget_bytes=None):
    """mode='norm': returns (normalized_x, mean, stdev); mean/stdev are (B,1,C)."""
    B, L, C = x.shape
    R = B * C
    itemsize = x.dtype.itemsize

    # Lane-dense internal layout; rows = (batch, feature) pairs fill sublanes.
    # TODO(synk): push the (B, C, L) layout to callers to drop these transposes.
    xt = jnp.transpose(x, (0, 2, 1)).reshape(R, L)

    vmem_limit, block_budget = _vmem_caps()
    if _block_budget_bytes is not None:
        block_budget = _block_budget_bytes
    tr, tl, fused = _plan(R, L, block_budget)
    n_r = pl.cdiv(R, tr)

    if affine:
        w_rows = jnp.broadcast_to(
            weight.astype(jnp.float32)[None, :], (B, C)).reshape(R, 1)
        b_rows = jnp.broadcast_to(
            bias.astype(jnp.float32)[None, :], (B, C)).reshape(R, 1)

    if fused:
        # One HBM read of x: stats + normalize together.  tl == L (full extent).
        kernel = functools.partial(_norm_fused_kernel, n_inv=1.0 / L, eps=eps,
                                   affine=affine)
        in_specs = [pl.BlockSpec((tr, L), lambda r: (r, 0))]
        args = [xt]
        if affine:
            in_specs += [pl.BlockSpec((tr, 1), lambda r: (r, 0)),
                         pl.BlockSpec((tr, 1), lambda r: (r, 0))]
            args += [w_rows, b_rows]
        yt, mean_r, std_r = pl.pallas_call(
            kernel,
            out_shape=(
                jax.ShapeDtypeStruct((R, L), x.dtype),
                jax.ShapeDtypeStruct((R, 1), jnp.float32),
                jax.ShapeDtypeStruct((R, 1), jnp.float32),
            ),
            grid_spec=pltpu.PrefetchScalarGridSpec(
                num_scalar_prefetch=0,
                grid=(n_r,),
                in_specs=in_specs,
                out_specs=[
                    pl.BlockSpec((tr, L), lambda r: (r, 0)),
                    pl.BlockSpec((tr, 1), lambda r: (r, 0)),
                    pl.BlockSpec((tr, 1), lambda r: (r, 0)),
                ],
            ),
            compiler_params=_compiler_params(vmem_limit, "parallel"),
            cost_estimate=pl.CostEstimate(
                flops=int(6 * R * L), transcendentals=0,
                bytes_accessed=int(2 * R * L * itemsize)),
        )(*args)
    else:
        # Pass 1: per-row stats; L is the (innermost) reduction axis.
        n_l = pl.cdiv(L, tl)
        need_mask = (L % tl) != 0
        stats_kernel = functools.partial(
            _stats_kernel, n_inv=1.0 / L, eps=eps, l_true=L, tl=tl,
            need_mask=need_mask, affine=affine)
        in_specs = [pl.BlockSpec((tr, tl), lambda r, l: (r, l))]
        args = [xt]
        if affine:
            in_specs += [pl.BlockSpec((tr, 1), lambda r, l: (r, 0)),
                         pl.BlockSpec((tr, 1), lambda r, l: (r, 0))]
            args += [w_rows, b_rows]
        mean_r, std_r, a_r, c_r = pl.pallas_call(
            stats_kernel,
            out_shape=tuple(jax.ShapeDtypeStruct((R, 1), jnp.float32)
                            for _ in range(4)),
            grid_spec=pltpu.PrefetchScalarGridSpec(
                num_scalar_prefetch=0,
                grid=(n_r, n_l),
                in_specs=in_specs,
                out_specs=[pl.BlockSpec((tr, 1), lambda r, l: (r, 0))
                           for _ in range(4)],
                scratch_shapes=[pltpu.VMEM((tr, 1), jnp.float32),
                                pltpu.VMEM((tr, 1), jnp.float32)],
            ),
            compiler_params=_compiler_params(vmem_limit, "parallel", "arbitrary"),
            cost_estimate=pl.CostEstimate(
                flops=int(3 * R * L), transcendentals=0,
                bytes_accessed=int(R * L * itemsize)),
        )(*args)

        # Pass 2: fully parallel y = x*a + c (folded constants, no divide).
        yt = pl.pallas_call(
            _scale_shift_kernel,
            out_shape=jax.ShapeDtypeStruct((R, L), x.dtype),
            grid_spec=pltpu.PrefetchScalarGridSpec(
                num_scalar_prefetch=0,
                grid=(n_r, n_l),
                in_specs=[pl.BlockSpec((tr, tl), lambda r, l: (r, l)),
                          pl.BlockSpec((tr, 1), lambda r, l: (r, 0)),
                          pl.BlockSpec((tr, 1), lambda r, l: (r, 0))],
                out_specs=pl.BlockSpec((tr, tl), lambda r, l: (r, l)),
            ),
            compiler_params=_compiler_params(vmem_limit, "parallel", "parallel"),
            cost_estimate=pl.CostEstimate(
                flops=int(2 * R * L), transcendentals=0,
                bytes_accessed=int(2 * R * L * itemsize)),
        )(xt, a_r, c_r)

    y = jnp.transpose(yt.reshape(B, C, L), (0, 2, 1))
    mean = jnp.transpose(mean_r.reshape(B, C, 1), (0, 2, 1)).astype(x.dtype)
    std = jnp.transpose(std_r.reshape(B, C, 1), (0, 2, 1)).astype(x.dtype)
    return y, mean, std


def revin_denorm(x, mean, std, weight=None, bias=None, *, eps=1e-5, affine=True,
                 target_slice=None, _block_budget_bytes=None):
    """mode='denorm': reverses normalization; mean/std are (B,1,C_full)."""
    if target_slice is not None:                               # plain-JAX glue
        if affine:
            weight = weight[target_slice]
            bias = bias[target_slice]
        mean = mean[:, :, target_slice]
        std = std[:, :, target_slice]

    B, L, C = x.shape
    R = B * C
    itemsize = x.dtype.itemsize

    xt = jnp.transpose(x, (0, 2, 1)).reshape(R, L)
    mean_r = jnp.transpose(mean.astype(jnp.float32), (0, 2, 1)).reshape(R, 1)
    std_r = jnp.transpose(std.astype(jnp.float32), (0, 2, 1)).reshape(R, 1)

    # Fold the per-row constants once in plain XLA (R floats, negligible):
    #   y = (x - b)/(w + eps^2) * std + mean  ==  x * scale + shift
    if affine:
        w_rows = jnp.broadcast_to(
            weight.astype(jnp.float32)[None, :], (B, C)).reshape(R, 1)
        b_rows = jnp.broadcast_to(
            bias.astype(jnp.float32)[None, :], (B, C)).reshape(R, 1)
        scale = std_r / (w_rows + eps * eps)
        shift = mean_r - b_rows * scale
    else:
        scale = std_r
        shift = mean_r

    vmem_limit, block_budget = _vmem_caps()
    if _block_budget_bytes is not None:
        block_budget = _block_budget_bytes
    tr, tl, _ = _plan(R, L, block_budget)
    n_r = pl.cdiv(R, tr)
    n_l = pl.cdiv(L, tl)

    yt = pl.pallas_call(
        _scale_shift_kernel,
        out_shape=jax.ShapeDtypeStruct((R, L), x.dtype),
        grid_spec=pltpu.PrefetchScalarGridSpec(
            num_scalar_prefetch=0,
            grid=(n_r, n_l),
            in_specs=[pl.BlockSpec((tr, tl), lambda r, l: (r, l)),
                      pl.BlockSpec((tr, 1), lambda r, l: (r, 0)),
                      pl.BlockSpec((tr, 1), lambda r, l: (r, 0))],
            out_specs=pl.BlockSpec((tr, tl), lambda r, l: (r, l)),
        ),
        compiler_params=_compiler_params(vmem_limit, "parallel", "parallel"),
        cost_estimate=pl.CostEstimate(
            flops=int(2 * R * L), transcendentals=0,
            bytes_accessed=int(2 * R * L * itemsize)),
    )(xt, scale, shift)
    return jnp.transpose(yt.reshape(B, C, L), (0, 2, 1))


# ----------------------------- reference -----------------------------------


def _revin_norm_ref(x, weight, bias, eps, affine=True):
    mean = jnp.mean(x, axis=1, keepdims=True)
    std = jnp.sqrt(jnp.var(x, axis=1, keepdims=True, ddof=0) + eps)
    y = (x - mean) / std
    if affine:
        y = y * weight + bias
    return y, mean, std


def _revin_denorm_ref(x, mean, std, weight, bias, eps, affine=True,
                      target_slice=None):
    if target_slice is not None:
        if affine:
            weight = weight[target_slice]
            bias = bias[target_slice]
        mean = mean[:, :, target_slice]
        std = std[:, :, target_slice]
    if affine:
        x = (x - bias) / (weight + eps * eps)
    return x * std + mean


# ----------------------------- main ----------------------------------------

if __name__ == "__main__":
    eps = 1e-5
    key = jax.random.PRNGKey(0)
    k1, k2 = jax.random.split(key)

    # --- Case A: small shapes -> fused single-read path, affine=True --------
    B, L, C = 2, 16, 8
    x = jax.random.normal(k1, (B, L, C), jnp.float32) * 3.0 + 1.5
    w = jnp.ones((C,), jnp.float32)       # torch init: ones / zeros
    b = jnp.zeros((C,), jnp.float32)

    y, mean, std = revin_norm(x, w, b, eps=eps, affine=True)
    y = jax.block_until_ready(y)
    x_rec = jax.block_until_ready(
        revin_denorm(y, mean, std, w, b, eps=eps, affine=True))

    y_r, mean_r, std_r = _revin_norm_ref(x, w, b, eps)
    x_rec_r = _revin_denorm_ref(y_r, mean_r, std_r, w, b, eps)
    assert jnp.allclose(y, y_r, atol=1e-4, rtol=1e-4)
    assert jnp.allclose(mean, mean_r, atol=1e-4, rtol=1e-4)
    assert jnp.allclose(std, std_r, atol=1e-4, rtol=1e-4)
    assert jnp.allclose(x_rec, x_rec_r, atol=1e-3, rtol=1e-3)

    # --- Case B: L=600 (not a 128 multiple), ragged C=5, target_slice -------
    B, L, C = 2, 600, 5
    x = jax.random.normal(k2, (B, L, C), jnp.float32) * 2.0 - 0.7
    w = jnp.full((C,), 1.3, jnp.float32)
    b = jnp.full((C,), 0.2, jnp.float32)
    y_r, mean_r, std_r = _revin_norm_ref(x, w, b, eps)

    # B1: fused path (full-L block, no padding, exact out_shape).
    y, mean, std = revin_norm(x, w, b, eps=eps, affine=True)
    y = jax.block_until_ready(y)
    assert jnp.allclose(y, y_r, atol=1e-4, rtol=1e-4)
    assert jnp.allclose(mean, mean_r, atol=1e-4, rtol=1e-4)
    assert jnp.allclose(std, std_r, atol=1e-4, rtol=1e-4)

    # B2: force the tiled 2-pass path (tiny block budget) with tail masking.
    y2, mean2, std2 = revin_norm(x, w, b, eps=eps, affine=True,
                                 _block_budget_bytes=8192)
    y2 = jax.block_until_ready(y2)
    assert jnp.allclose(y2, y_r, atol=1e-4, rtol=1e-4)
    assert jnp.allclose(mean2, mean_r, atol=1e-4, rtol=1e-4)
    assert jnp.allclose(std2, std_r, atol=1e-4, rtol=1e-4)

    # Denorm with target_slice (fused and forced-tiled grids).
    sl = slice(0, 3)
    d = jax.block_until_ready(
        revin_denorm(y_r[:, :, sl], mean_r, std_r, w, b, eps=eps, affine=True,
                     target_slice=sl))
    d2 = jax.block_until_ready(
        revin_denorm(y_r[:, :, sl], mean_r, std_r, w, b, eps=eps, affine=True,
                     target_slice=sl, _block_budget_bytes=4096))
    d_r = _revin_denorm_ref(y_r[:, :, sl], mean_r, std_r, w, b, eps,
                            target_slice=sl)
    assert jnp.allclose(d, d_r, atol=1e-3, rtol=1e-3)
    assert jnp.allclose(d2, d_r, atol=1e-3, rtol=1e-3)

    # --- Case C: affine=False (no weight/bias DMA at all) --------------------
    B, L, C = 2, 16, 8
    x = jax.random.normal(k1, (B, L, C), jnp.float32) * 3.0 + 1.5
    y, mean, std = revin_norm(x, eps=eps, affine=False)
    y = jax.block_until_ready(y)
    x_rec = jax.block_until_ready(
        revin_denorm(y, mean, std, eps=eps, affine=False))
    y_r, mean_r, std_r = _revin_norm_ref(x, None, None, eps, affine=False)
    assert jnp.allclose(y, y_r, atol=1e-4, rtol=1e-4)
    assert jnp.allclose(x_rec, x, atol=1e-3, rtol=1e-3)

    print("KERNEL_OK")
</pallas_src>

<mosaic_0001>
module attributes {stable_mosaic.version = 11 : i64} {
  func.func @_norm_fused_kernel(%arg0: i32, %arg1: memref<16x16xf32, #tpu.memory_space<vmem>>, %arg2: memref<16x1xf32, #tpu.memory_space<vmem>>, %arg3: memref<16x1xf32, #tpu.memory_space<vmem>>, %arg4: memref<16x16xf32, #tpu.memory_space<vmem>>, %arg5: memref<16x1xf32, #tpu.memory_space<vmem>>, %arg6: memref<16x1xf32, #tpu.memory_space<vmem>>) attributes {dimension_semantics = [#tpu.dimension_semantics<parallel>], iteration_bounds = array<i64: 1>, scalar_prefetch = 0 : i64, scratch_operands = 0 : i64, tpu.core_type = #tpu.core_type<tc>, window_params = [{transform_indices = @transform_0, window_bounds = array<i64: 16, 16>}, {transform_indices = @transform_1, window_bounds = array<i64: 16, 1>}, {transform_indices = @transform_2, window_bounds = array<i64: 16, 1>}, {transform_indices = @transform_3, window_bounds = array<i64: 16, 16>}, {transform_indices = @transform_4, window_bounds = array<i64: 16, 1>}, {transform_indices = @transform_5, window_bounds = array<i64: 16, 1>}]} {
    %c0 = arith.constant 0 : index
    %c0_0 = arith.constant 0 : index
    %0 = vector.load %arg1[%c0, %c0_0] : memref<16x16xf32, #tpu.memory_space<vmem>>, vector<16x16xf32>
    %cst = arith.constant dense<0.000000e+00> : vector<16xf32>
    %1 = vector.multi_reduction <add>, %0, %cst [1] : vector<16x16xf32> to vector<16xf32>
    %2 = vector.shape_cast %1 : vector<16xf32> to vector<16x1xf32>
    %cst_1 = arith.constant 6.250000e-02 : f32
    %3 = vector.broadcast %cst_1 : f32 to vector<16x1xf32>
    %4 = arith.mulf %2, %3 : vector<16x1xf32>
    %5 = vector.broadcast %4 : vector<16x1xf32> to vector<16x16xf32>
    %6 = arith.subf %0, %5 : vector<16x16xf32>
    %7 = arith.mulf %6, %6 : vector<16x16xf32>
    %cst_2 = arith.constant dense<0.000000e+00> : vector<16xf32>
    %8 = vector.multi_reduction <add>, %7, %cst_2 [1] : vector<16x16xf32> to vector<16xf32>
    %9 = vector.shape_cast %8 : vector<16xf32> to vector<16x1xf32>
    %cst_3 = arith.constant 6.250000e-02 : f32
    %10 = vector.broadcast %cst_3 : f32 to vector<16x1xf32>
    %11 = arith.mulf %9, %10 : vector<16x1xf32>
    %cst_4 = arith.constant 9.99999974E-6 : f32
    %12 = vector.broadcast %cst_4 : f32 to vector<16x1xf32>
    %13 = arith.addf %11, %12 : vector<16x1xf32>
    %14 = math.sqrt %13 : vector<16x1xf32>
    %cst_5 = arith.constant 1.000000e+00 : f32
    %15 = vector.broadcast %cst_5 : f32 to vector<16x1xf32>
    %16 = arith.divf %15, %14 : vector<16x1xf32>
    %c0_6 = arith.constant 0 : index
    %c0_7 = arith.constant 0 : index
    %17 = vector.load %arg2[%c0_6, %c0_7] : memref<16x1xf32, #tpu.memory_space<vmem>>, vector<16x1xf32>
    %18 = arith.mulf %17, %16 : vector<16x1xf32>
    %19 = vector.broadcast %18 : vector<16x1xf32> to vector<16x16xf32>
    %20 = arith.mulf %6, %19 : vector<16x16xf32>
    %c0_8 = arith.constant 0 : index
    %c0_9 = arith.constant 0 : index
    %21 = vector.load %arg3[%c0_8, %c0_9] : memref<16x1xf32, #tpu.memory_space<vmem>>, vector<16x1xf32>
    %22 = vector.broadcast %21 : vector<16x1xf32> to vector<16x16xf32>
    %23 = arith.addf %20, %22 : vector<16x16xf32>
    %c0_10 = arith.constant 0 : index
    %c0_11 = arith.constant 0 : index
    %24 = vector.load %arg4[%c0_10, %c0_11] : memref<16x16xf32, #tpu.memory_space<vmem>>, vector<16x16xf32>
    tpu.vector_store %arg4[%c0_10, %c0_11], %23 {strides = array<i32>} : memref<16x16xf32, #tpu.memory_space<vmem>>, vector<16x16xf32>,
    %c0_12 = arith.constant 0 : index
    %c0_13 = arith.constant 0 : index
    %25 = vector.load %arg5[%c0_12, %c0_13] : memref<16x1xf32, #tpu.memory_space<vmem>>, vector<16x1xf32>
    tpu.vector_store %arg5[%c0_12, %c0_13], %4 {strides = array<i32>} : memref<16x1xf32, #tpu.memory_space<vmem>>, vector<16x1xf32>,
    %c0_14 = arith.constant 0 : index
    %c0_15 = arith.constant 0 : index
    %26 = vector.load %arg6[%c0_14, %c0_15] : memref<16x1xf32, #tpu.memory_space<vmem>>, vector<16x1xf32>
    tpu.vector_store %arg6[%c0_14, %c0_15], %14 {strides = array<i32>} : memref<16x1xf32, #tpu.memory_space<vmem>>, vector<16x1xf32>,
    return
  }
  func.func @transform_0(%arg0: i32) -> (i32, i32) {
    %c0_i32 = arith.constant 0 : i32
    %c0_i32_0 = arith.constant 0 : i32
    return %arg0, %c0_i32 : i32, i32
  }
  func.func @transform_1(%arg0: i32) -> (i32, i32) {
    %c0_i32 = arith.constant 0 : i32
    %c0_i32_0 = arith.constant 0 : i32
    return %arg0, %c0_i32 : i32, i32
  }
  func.func @transform_2(%arg0: i32) -> (i32, i32) {
    %c0_i32 = arith.constant 0 : i32
    %c0_i32_0 = arith.constant 0 : i32
    return %arg0, %c0_i32 : i32, i32
  }
  func.func @transform_3(%arg0: i32) -> (i32, i32) {
    %c0_i32 = arith.constant 0 : i32
    %c0_i32_0 = arith.constant 0 : i32
    return %arg0, %c0_i32 : i32, i32
  }
  func.func @transform_4(%arg0: i32) -> (i32, i32) {
    %c0_i32 = arith.constant 0 : i32
    %c0_i32_0 = arith.constant 0 : i32
    return %arg0, %c0_i32 : i32, i32
  }
  func.func @transform_5(%arg0: i32) -> (i32, i32) {
    %c0_i32 = arith.constant 0 : i32
    %c0_i32_0 = arith.constant 0 : i32
    return %arg0, %c0_i32 : i32, i32
  }
}

</mosaic_0001>

<llo_original>
// kernel: tpu_custom_call.1
$region0: #{tpu_custom_call.1}
  #allocation0 [shape = 'u32[]', space=smem, size = 0x4, offset = 0x4, fixed_abs, tag = 'smem constant byte address 0x4 - core index']
  #allocation1 [shape = 'u32[144,128]{1,0:T(1,128)}', space=vmem, size = 0x12000, scoped, tag = 'internal scratch']
  %s0 = inlined_call_operand.vmem [shape: f32[16,16], index: 0, kind: input, shape index: {}]
  %s1 = inlined_call_operand.vmem [shape: f32[16,1], index: 1, kind: input, shape index: {}]
  %s2 = inlined_call_operand.vmem [shape: f32[16,1], index: 2, kind: input, shape index: {}]
  %s3 = inlined_call_operand.hbm [shape: f32[16,16], index: 3, kind: output, shape index: {0}]
  %s4 = inlined_call_operand.vmem [shape: f32[16,1], index: 4, kind: output, shape index: {1}]
  %s5 = inlined_call_operand.vmem [shape: f32[16,1], index: 5, kind: output, shape index: {2}]
  %6 = xla_tuple %s3, %s4, %s5
  %s7 = sld [smem:[#allocation0]]
  $region38: #{tpu_custom_call.1} parent=0
    _
  %s9 = ssub.s32 1, %s7
  %s10 = scalar_select 0, %s9, %s7
  $region1: #{tpu_custom_call.1} parent=0
    #allocation2 [shape = 'u8[8192]{0}', space=vmem, size = 0x2000, scoped, tag = 'output window, operand 0, single buffered']
    #allocation3 [shape = 's32[1]{0}', space=sflag, size = 0x4, scoped, tag = 'scoped memory for tpu_custom_call.1']
    %11 = vsyncpa [#allocation3], 0
    // Predicated region
    $region2: #{tpu_custom_call.1} parent=1 // pred_check
      _
    $region3: #{tpu_custom_call.1} parent=1 // pred_check_branch
      %13 = sbr.rel (0) target = $region5
    $region4: #{tpu_custom_call.1} parent=1 // pred_region
      _
    $region5: #{tpu_custom_call.1} parent=1 // pred_fallthru
      _
    // Predicated region
    $region6: #{tpu_custom_call.1} parent=1 // pred_check
      _
    $region7: #{tpu_custom_call.1} parent=1 // pred_check_branch
      %15 = sbr.rel (0) target = $region9
    $region8: #{tpu_custom_call.1} parent=1 // pred_region
      _
    $region9: #{tpu_custom_call.1} parent=1 // pred_fallthru
      _
    // Predicated region
    $region10: #{tpu_custom_call.1} parent=1 // pred_check
      _
    $region11: #{tpu_custom_call.1} parent=1 // pred_check_branch
      %17 = sbr.rel (0) target = $region13
    $region12: #{tpu_custom_call.1} parent=1 // pred_region
      _
    $region13: #{tpu_custom_call.1} parent=1 // pred_fallthru
      _
    %v18 = vld [vmem:[%s0] sm:$0xff]
    %v19 = vld [vmem:[%s0 + $0x8] sm:$0xff]
    %vm20 = vcmask 130048
    %v21 = vsel %vm20, %v18, 0.0
    %22 = vadd.xlane.f32.xlu0 %v21
    %v23 = vpop.xlane.xlu0 %22
    %v24 = vsel %vm20, %v19, 0.0
    %25 = vadd.xlane.f32.xlu0 %v24
    %v26 = vpop.xlane.xlu0 %25
    %v27 = vmul.f32 %v23, 0.0625
    %v28 = vmul.f32 %v26, 0.0625
    %v29 = vsub.f32 %v18, %v27
    %v30 = vsub.f32 %v19, %v28
    %v31 = vmul.f32 %v29, %v29
    %v32 = vmul.f32 %v30, %v30
    %v33 = vsel %vm20, %v31, 0.0
    %34 = vadd.xlane.f32.xlu0 %v33
    %v35 = vpop.xlane.xlu0 %34
    %v36 = vsel %vm20, %v32, 0.0
    %37 = vadd.xlane.f32.xlu0 %v36
    %v38 = vpop.xlane.xlu0 %37
    %v39 = vmul.f32 %v35, 0.0625
    %v40 = vmul.f32 %v38, 0.0625
    %v41 = vadd.f32 %v39, 1e-05
    %v42 = vadd.f32 %v40, 1e-05
    %v43 = vrsqrt.pop %v41
    %v44 = vmul.f32 %v41, %v43
    %vm45 = vcmp.eq.f32.partialorder %v41, inf
    %v46 = vsel %vm45, %v41, %v44
    %vm47 = vcmp.eq.f32.partialorder %v41, 0.0
    %v48 = vand.u32 %v41, 2147483648
    %v49 = vsel %vm47, %v48, %v46
    %v50 = vrsqrt.pop %v42
    %v51 = vmul.f32 %v42, %v50
    %vm52 = vcmp.eq.f32.partialorder %v42, inf
    %v53 = vsel %vm52, %v42, %v51
    %vm54 = vcmp.eq.f32.partialorder %v42, 0.0
    %v55 = vand.u32 %v42, 2147483648
    %v56 = vsel %vm54, %v55, %v53
    %v57 = vrcp.pop %v49
    %v58 = vmul.f32 1.0, %v57
    %v59 = vrcp.pop %v56
    %v60 = vmul.f32 1.0, %v59
    %v61 = vld [vmem:[%s1] sm:$0xff]
    %v62 = vld [vmem:[%s1 + $0x8] sm:$0xff]
    %v63 = vmul.f32 %v61, %v58
    %v64 = vmul.f32 %v62, %v60
    %66 = vset.pattern.permute.xlu0 0
    %67 = vperm.xlu0 %66, %v63
    %v68 = vpop.permute.xlu0 %67
    %71 = vset.pattern.permute.xlu0 0
    %72 = vperm.xlu0 %71, %v64
    %v73 = vpop.permute.xlu0 %72
    %v75 = vmul.f32 %v29, %v68
    %v76 = vmul.f32 %v30, %v73
    %v77 = vld [vmem:[%s2] sm:$0xff]
    %v78 = vld [vmem:[%s2 + $0x8] sm:$0xff]
    %80 = vset.pattern.permute.xlu0 0
    %81 = vperm.xlu0 %80, %v77
    %v82 = vpop.permute.xlu0 %81
    %85 = vset.pattern.permute.xlu0 0
    %86 = vperm.xlu0 %85, %v78
    %v87 = vpop.permute.xlu0 %86
    %v89 = vadd.f32 %v75, %v82
    %v90 = vadd.f32 %v76, %v87
    %91 = vst.msk [vmem:[#allocation2] sm:$0xff] %vm20, %v89
    %92 = vst.msk [vmem:[#allocation2 + $0x8] sm:$0xff] %vm20, %v90
    %vm93 = vcmask 7168
    %94 = vst.msk [vmem:[%s4] sm:$0xff] %vm93, %v27
    %95 = vst.msk [vmem:[%s4 + $0x8] sm:$0xff] %vm93, %v28
    %96 = vst.msk [vmem:[%s5] sm:$0xff] %vm93, %v49
    %97 = vst.msk [vmem:[%s5 + $0x8] sm:$0xff] %vm93, %v56
    // Predicated region
    $region14: #{tpu_custom_call.1} parent=1 // pred_check
      _
    $region15: #{tpu_custom_call.1} parent=1 // pred_check_branch
      %99 = sbr.rel (0) target = $region17
    $region16: #{tpu_custom_call.1} parent=1 // pred_region
      %s101 = ssub.s32 256, 256
      %102 = vsyncadd [#allocation3], %s101
      %s103 = sshll.u32 [#allocation2], 4
      %s104 = int_to_ptr.vmem [resolvable:$true] %s103
      %109 = dma.vmem_to_hbm [thread:$0]  %s104, 256, %s3, [#allocation3], 128, 128, 8
    $region17: #{tpu_custom_call.1} parent=1 // pred_fallthru
      _
    // Predicated region
    $region18: #{tpu_custom_call.1} parent=1 // pred_check
      _
    $region19: #{tpu_custom_call.1} parent=1 // pred_check_branch
      %111 = sbr.rel (0) target = $region21
    $region20: #{tpu_custom_call.1} parent=1 // pred_region
      _
    $region21: #{tpu_custom_call.1} parent=1 // pred_fallthru
      _
    // Predicated region
    $region22: #{tpu_custom_call.1} parent=1 // pred_check
      _
    $region23: #{tpu_custom_call.1} parent=1 // pred_check_branch
      %113 = sbr.rel (0) target = $region25
    $region24: #{tpu_custom_call.1} parent=1 // pred_region
      _
    $region25: #{tpu_custom_call.1} parent=1 // pred_fallthru
      _
    // Predicated region
    $region26: #{tpu_custom_call.1} parent=1 // pred_check
      _
    $region27: #{tpu_custom_call.1} parent=1 // pred_check_branch
      %115 = sbr.rel (0) target = $region29
    $region28: #{tpu_custom_call.1} parent=1 // pred_region
      %116 = dma.done [#allocation3], 256
    $region29: #{tpu_custom_call.1} parent=1 // pred_fallthru
      _
    // Predicated region
    $region30: #{tpu_custom_call.1} parent=1 // pred_check
      _
    $region31: #{tpu_custom_call.1} parent=1 // pred_check_branch
      %118 = sbr.rel (0) target = $region33
    $region32: #{tpu_custom_call.1} parent=1 // pred_region
      _
    $region33: #{tpu_custom_call.1} parent=1 // pred_fallthru
      _
    // Predicated region
    $region34: #{tpu_custom_call.1} parent=1 // pred_check
      _
    $region35: #{tpu_custom_call.1} parent=1 // pred_check_branch
      %120 = sbr.rel (0) target = $region37
    $region36: #{tpu_custom_call.1} parent=1 // pred_region
      _
    $region37: #{tpu_custom_call.1} parent=1 // pred_fallthru
      _
    %121 = vsyncpa [#allocation3], 1

</llo_original>
